<compile_context>
chip_gen: v6e
topology: v6e:2x2x1
jax: 0.10.0
libtpu: 0.0.40
codegen_flags: <defaults>
</compile_context>

<pallas_src>
import functools

import jax
import jax.numpy as jnp
from jax.experimental import pallas as pl
from jax.experimental.pallas import tpu as pltpu


# ----------------------------------------------------------------------------- kernels


def _sepi_step_kernel(r_w_ref, a_t_ref, beff_ref, r_blk_ref, out_ref, *, leak, gamma):
    """One lane-dense column block of a single reservoir update.

    r_w_ref   : (1, Np)   full state row, weight dtype (resident across blocks)
    a_t_ref   : (Np, TN)  column block of A^T (streamed)
    beff_ref  : (1, TN)   block of effective bias  b + Win @ p  (f32)
    r_blk_ref : (1, TN)   f32 block of the state for the leak term
    out_ref   : (1, TN)   output block (f32)
    """
    z = jnp.dot(r_w_ref[...], a_t_ref[...], preferred_element_type=jnp.float32)
    z = z + beff_ref[...]
    c_lin = (leak - 1.0) / gamma
    c_tanh = (1.0 - leak) / gamma
    out_ref[...] = c_lin * r_blk_ref[...] + c_tanh * jnp.tanh(z)


def _sepi_rollout_kernel(beff_ref, a_t_ref, r0_ref, out_ref, r_f32, r_w, *, leak, gamma):
    """T-step rollout; A^T stays VMEM-resident, r carried in VMEM scratch.

    beff_ref : (1, 1, Np)  per-step effective bias  b + Win @ p_t  (f32)
    a_t_ref  : (Np, Np)    A^T (same block every step -> resident)
    r0_ref   : (1, Np)     initial state row (f32)
    out_ref  : (1, 1, Np)  state after this step (f32)
    r_f32    : (1, Np)     f32 state carry (scratch)
    r_w      : (1, Np)     weight-dtype state carry (scratch)
    """
    t = pl.program_id(0)

    @pl.when(t == 0)
    def _():
        r_f32[...] = r0_ref[...]
        r_w[...] = r0_ref[...].astype(r_w.dtype)

    z = jnp.dot(r_w[...], a_t_ref[...], preferred_element_type=jnp.float32)
    z = z + beff_ref[0]
    c_lin = (leak - 1.0) / gamma
    c_tanh = (1.0 - leak) / gamma
    new_r = c_lin * r_f32[...] + c_tanh * jnp.tanh(z)
    r_f32[...] = new_r
    r_w[...] = new_r.astype(r_w.dtype)
    out_ref[0] = new_r


# ----------------------------------------------------------------- pallas_call wrappers


def _step_impl(A_T, Win_T, b_row, p_row, r, *, leak, gamma, N, Np, tn, vmem_limit_bytes):
    """Single update step. A_T/Win_T/b_row are prepared once outside (no per-call prep)."""
    wdtype = A_T.dtype
    r_flat = jnp.reshape(r, (-1,)).astype(jnp.float32)
    r_row = jnp.zeros((1, Np), jnp.float32).at[0, :N].set(r_flat)        # padded lanes = 0
    b_eff = b_row + jnp.dot(p_row, Win_T)                                # (1, Np) f32, glue
    r_w = r_row.astype(wdtype)

    num_blocks = Np // tn
    kernel = functools.partial(_sepi_step_kernel, leak=leak, gamma=gamma)

    out_row = pl.pallas_call(
        kernel,
        out_shape=jax.ShapeDtypeStruct((1, Np), jnp.float32),
        grid=(num_blocks,),
        in_specs=[
            pl.BlockSpec((1, Np), lambda i: (0, 0)),    # full state row (weight dtype)
            pl.BlockSpec((Np, tn), lambda i: (0, i)),   # A^T column block (streamed)
            pl.BlockSpec((1, tn), lambda i: (0, i)),    # effective bias block
            pl.BlockSpec((1, tn), lambda i: (0, i)),    # f32 state block for leak term
        ],
        out_specs=pl.BlockSpec((1, tn), lambda i: (0, i)),
        compiler_params=pltpu.CompilerParams(
            dimension_semantics=("parallel",),
            vmem_limit_bytes=vmem_limit_bytes,
        ),
        cost_estimate=pl.CostEstimate(
            flops=2 * Np * Np + 5 * Np,
            transcendentals=Np,
            bytes_accessed=Np * Np * wdtype.itemsize + 16 * Np,
        ),
    )(r_w, A_T, b_eff, r_row)

    return out_row[0, :N].reshape(N, 1)


def _rollout_impl(A_T, Win_T, b_row, p_seq, r0, *, leak, gamma, N, Np, vmem_limit_bytes):
    """T-step rollout; reads A from HBM exactly once (kept VMEM-resident)."""
    wdtype = A_T.dtype
    T = p_seq.shape[0]
    r0_flat = jnp.reshape(r0, (-1,)).astype(jnp.float32)
    r0_row = jnp.zeros((1, Np), jnp.float32).at[0, :N].set(r0_flat)
    b_eff = (b_row + jnp.dot(p_seq, Win_T)).reshape(T, 1, Np)            # (T, 1, Np) f32

    kernel = functools.partial(_sepi_rollout_kernel, leak=leak, gamma=gamma)

    traj = pl.pallas_call(
        kernel,
        out_shape=jax.ShapeDtypeStruct((T, 1, Np), jnp.float32),
        grid=(T,),
        in_specs=[
            pl.BlockSpec((1, 1, Np), lambda t: (t, 0, 0)),  # per-step bias
            pl.BlockSpec((Np, Np), lambda t: (0, 0)),       # A^T: resident across time
            pl.BlockSpec((1, Np), lambda t: (0, 0)),        # initial state
        ],
        out_specs=pl.BlockSpec((1, 1, Np), lambda t: (t, 0, 0)),
        scratch_shapes=[
            pltpu.VMEM((1, Np), jnp.float32),
            pltpu.VMEM((1, Np), wdtype),
        ],
        compiler_params=pltpu.CompilerParams(
            dimension_semantics=("arbitrary",),
            vmem_limit_bytes=vmem_limit_bytes,
        ),
        cost_estimate=pl.CostEstimate(
            flops=T * (2 * Np * Np + 5 * Np),
            transcendentals=T * Np,
            bytes_accessed=Np * Np * wdtype.itemsize + T * 12 * Np,
        ),
    )(b_eff, A_T, r0_row)

    return traj[:, 0, :N]                                                # (T, N)


# --------------------------------------------------------------------------- utilities


def _num_tensorcores():
    """Best-effort TensorCore count per chip (2 on v7x). Falls back to 1."""
    try:
        info = pltpu.get_tpu_info()
    except Exception:
        return 1
    for attr in ("num_cores", "num_tensorcores", "tensorcores_per_chip",
                 "cores_per_chip", "core_count"):
        v = getattr(info, attr, None)
        if isinstance(v, int) and 1 <= v <= 8:
            return v
    return 1


def _pick_tn(Np, weight_bytes, *, budget_bytes, min_blocks=1):
    """Largest 128-multiple column width dividing Np s.t. the double-buffered (Np, tn)
    A^T tile fits `budget_bytes`, with at least `min_blocks` blocks (for 2-TC chips)."""
    cap = (max(Np // max(min_blocks, 1), 128) // 128) * 128
    by_budget = (max(budget_bytes // (2 * Np * weight_bytes), 128) // 128) * 128
    tn = max(128, min(cap, by_budget))
    while Np % tn:
        tn -= 128
    return max(tn, 128)


# ------------------------------------------------------------------------------- module


class SepiPallas:
    """Pallas TPU port of the `Sepi` module.

    All fixed-weight preparation (transpose, cast to the streamed weight dtype,
    zero-padding of N to a multiple of 128) happens ONCE here, never per step.
    """

    def __init__(self, Win, A, leak, b, gamma, *, weight_dtype=jnp.bfloat16,
                 tn=None, vmem_limit_bytes=48 * 1024 * 1024):
        Win = jnp.asarray(Win, jnp.float32)
        A = jnp.asarray(A, jnp.float32)
        b = jnp.asarray(b, jnp.float32).reshape(-1)
        N, M = Win.shape
        assert A.shape == (N, N) and b.shape == (N,)

        Np = ((N + 127) // 128) * 128
        self.N, self.M, self.Np = N, M, Np
        self.leak, self.gamma = float(leak), float(gamma)
        self.weight_dtype = jnp.dtype(weight_dtype)

        # ---- one-time weight prep (zero-padded; padded state provably stays 0) ----
        A_pad = jnp.zeros((Np, Np), jnp.float32).at[:N, :N].set(A)
        self.A_T = A_pad.T.astype(self.weight_dtype)                      # (Np, Np)
        self.Win_T = jnp.zeros((M, Np), jnp.float32).at[:, :N].set(Win.T)  # (M, Np) f32
        self.b_row = jnp.zeros((1, Np), jnp.float32).at[0, :N].set(b)      # (1, Np)

        w_bytes = self.weight_dtype.itemsize
        budget = max(2 * 1024 * 1024, vmem_limit_bytes // 2)
        if tn is None:
            num_tc = _num_tensorcores()
            min_blocks = num_tc if (num_tc >= 2 and Np >= 256) else 1
            tn = _pick_tn(Np, w_bytes, budget_bytes=budget, min_blocks=min_blocks)
        assert Np % tn == 0 and tn % 128 == 0
        self.tn = tn

        # A^T can stay VMEM-resident for the fused rollout if it fits (with headroom).
        self._a_resident_ok = Np * Np * w_bytes <= vmem_limit_bytes - (4 * 1024 * 1024)

        self._step_jit = jax.jit(functools.partial(
            _step_impl, leak=self.leak, gamma=self.gamma,
            N=N, Np=Np, tn=tn, vmem_limit_bytes=vmem_limit_bytes))
        self._rollout_jit = jax.jit(functools.partial(
            _rollout_impl, leak=self.leak, gamma=self.gamma,
            N=N, Np=Np, vmem_limit_bytes=vmem_limit_bytes))

    # TODO(synk): deterministic stand-in for the external cubic-spline drivers csp[i].fit(t).
    def _features_rows(self, ts):
        ts = jnp.asarray(ts, jnp.float32).reshape(-1, 1)                  # (T, 1)
        freqs = jnp.arange(1, self.M + 1, dtype=jnp.float32).reshape(1, self.M)
        return jnp.sin(ts * freqs) + 0.1 * jnp.cos(2.0 * ts * freqs)      # (T, M)

    def features(self, t):
        return self._features_rows(jnp.asarray([t], jnp.float32)).reshape(self.M, 1)

    def forward(self, t, r):
        """One module step: returns guy with shape (N, 1)."""
        p_row = self._features_rows(jnp.asarray([t], jnp.float32))        # (1, M)
        return self._step_jit(self.A_T, self.Win_T, self.b_row, p_row,
                              jnp.asarray(r, jnp.float32))

    def rollout(self, ts, r0):
        """Apply the module T times (one per entry of ts); returns (T, N, 1)."""
        ts = jnp.asarray(ts, jnp.float32).reshape(-1)
        p_seq = self._features_rows(ts)                                   # (T, M)
        r0 = jnp.asarray(r0, jnp.float32)
        if self._a_resident_ok:
            traj = self._rollout_jit(self.A_T, self.Win_T, self.b_row, p_seq, r0)
            return traj[:, :, None]
        # TODO(synk): tiled A-resident rollout for reservoirs too large for VMEM.
        outs, r = [], r0
        for i in range(ts.shape[0]):
            r = self._step_jit(self.A_T, self.Win_T, self.b_row, p_seq[i:i + 1, :], r)
            outs.append(r)
        return jnp.stack(outs, axis=0)


# ------------------------------------------------------------------------------ testing


def sepi_reference(Win, A, p, r, b, leak, gamma):
    return (leak - 1.0) / gamma * r + (1.0 - leak) / gamma * jnp.tanh(Win @ p + A @ r + b)


def _make_inputs(key, N, M):
    k_win, k_a, k_r, k_b = jax.random.split(key, 4)
    Win = (jax.random.uniform(k_win, (N, M), jnp.float32) * 2.0 - 1.0) * 0.5
    A = jax.random.normal(k_a, (N, N), jnp.float32) / jnp.sqrt(jnp.float32(N))
    r = jax.random.normal(k_r, (N, 1), jnp.float32) * 0.1
    b = jax.random.normal(k_b, (N, 1), jnp.float32) * 0.1
    return Win, A, r, b


if __name__ == "__main__":
    leak, gamma = 0.1, 10.0
    key = jax.random.PRNGKey(0)
    k1, k2 = jax.random.split(key)

    # Case 1: single module step, N multiple of 128.
    N, M = 256, 8
    Win, A, r0, b = _make_inputs(k1, N, M)
    model = SepiPallas(Win, A, leak, b, gamma)

    t0 = 0.37
    out = jax.block_until_ready(model.forward(t0, r0))
    ref = sepi_reference(Win, A, model.features(t0), r0, b, leak, gamma)
    assert out.shape == (N, 1)
    assert jnp.allclose(out, ref, atol=5e-3, rtol=5e-2), "mismatch vs reference (step, N=256)"

    # Second call: exercises the hot path with no per-call weight cast/transpose.
    jax.block_until_ready(model.forward(0.91, r0))

    # Case 2: fused T-step rollout (A^T read from HBM once, VMEM-resident across time).
    ts = jnp.linspace(0.1, 0.9, 6)
    traj = jax.block_until_ready(model.rollout(ts, r0))
    assert traj.shape == (6, N, 1)
    rr, refs = r0, []
    for i in range(ts.shape[0]):
        tt = float(ts[i])
        rr = sepi_reference(Win, A, model.features(tt), rr, b, leak, gamma)
        refs.append(rr)
    ref_traj = jnp.stack(refs, axis=0)
    assert jnp.allclose(traj, ref_traj, atol=1e-2, rtol=5e-2), "mismatch vs reference (rollout)"

    # Case 3: non-multiple-of-128 reservoir exercising the zero-padding path.
    N2, M2 = 200, 6
    Win2, A2, r2, b2 = _make_inputs(k2, N2, M2)
    model2 = SepiPallas(Win2, A2, leak, b2, gamma)
    out2 = jax.block_until_ready(model2.forward(0.5, r2))
    ref2 = sepi_reference(Win2, A2, model2.features(0.5), r2, b2, leak, gamma)
    assert out2.shape == (N2, 1)
    assert jnp.allclose(out2, ref2, atol=5e-3, rtol=5e-2), "mismatch vs reference (step, N=200)"

    print("KERNEL_OK")
</pallas_src>

<mosaic_0001>
module attributes {stable_mosaic.version = 11 : i64} {
  func.func @_sepi_step_kernel(%arg0: i32, %arg1: memref<1x256xbf16, #tpu.memory_space<vmem>>, %arg2: memref<256x256xbf16, #tpu.memory_space<vmem>>, %arg3: memref<1x256xf32, #tpu.memory_space<vmem>>, %arg4: memref<1x256xf32, #tpu.memory_space<vmem>>, %arg5: memref<1x256xf32, #tpu.memory_space<vmem>>) attributes {dimension_semantics = [#tpu.dimension_semantics<parallel>], iteration_bounds = array<i64: 1>, scalar_prefetch = 0 : i64, scratch_operands = 0 : i64, tpu.core_type = #tpu.core_type<tc>, window_params = [{pipeline_mode = #tpu.pipeline_mode<synchronous>, transform_indices = @transform_0, window_bounds = array<i64: 1, 256>}, {transform_indices = @transform_1, window_bounds = array<i64: 256, 256>}, {transform_indices = @transform_2, window_bounds = array<i64: 1, 256>}, {transform_indices = @transform_3, window_bounds = array<i64: 1, 256>}, {transform_indices = @transform_4, window_bounds = array<i64: 1, 256>}]} {
    %c0 = arith.constant 0 : index
    %c0_0 = arith.constant 0 : index
    %0 = vector.load %arg1[%c0, %c0_0] : memref<1x256xbf16, #tpu.memory_space<vmem>>, vector<1x256xbf16>
    %c0_1 = arith.constant 0 : index
    %c0_2 = arith.constant 0 : index
    %1 = vector.load %arg2[%c0_1, %c0_2] : memref<256x256xbf16, #tpu.memory_space<vmem>>, vector<256x256xbf16>
    %cst = arith.constant dense<0.000000e+00> : vector<1x256xf32>
    %2 = tpu.matmul %0, %1, %cst {dimension_numbers = #tpu.dot_dimension_numbers<[1], [0], [0], [1], [0, 0, 1, 1], [], []>} : vector<1x256xbf16>, vector<256x256xbf16>, vector<1x256xf32> -> vector<1x256xf32>
    %c0_3 = arith.constant 0 : index
    %c0_4 = arith.constant 0 : index
    %3 = vector.load %arg3[%c0_3, %c0_4] : memref<1x256xf32, #tpu.memory_space<vmem>>, vector<1x256xf32>
    %4 = arith.addf %2, %3 : vector<1x256xf32>
    %c0_5 = arith.constant 0 : index
    %c0_6 = arith.constant 0 : index
    %5 = vector.load %arg4[%c0_5, %c0_6] : memref<1x256xf32, #tpu.memory_space<vmem>>, vector<1x256xf32>
    %cst_7 = arith.constant -9.000000e-02 : f32
    %6 = vector.broadcast %cst_7 : f32 to vector<1x256xf32>
    %7 = arith.mulf %6, %5 : vector<1x256xf32>
    %8 = math.tanh %4 : vector<1x256xf32>
    %cst_8 = arith.constant 9.000000e-02 : f32
    %9 = vector.broadcast %cst_8 : f32 to vector<1x256xf32>
    %10 = arith.mulf %9, %8 : vector<1x256xf32>
    %11 = arith.addf %7, %10 : vector<1x256xf32>
    %c0_9 = arith.constant 0 : index
    %c0_10 = arith.constant 0 : index
    %12 = vector.load %arg5[%c0_9, %c0_10] : memref<1x256xf32, #tpu.memory_space<vmem>>, vector<1x256xf32>
    tpu.vector_store %arg5[%c0_9, %c0_10], %11 {strides = array<i32>} : memref<1x256xf32, #tpu.memory_space<vmem>>, vector<1x256xf32>,
    return
  }
  func.func @transform_0(%arg0: i32) -> (i32, i32) {
    %c0_i32 = arith.constant 0 : i32
    %c0_i32_0 = arith.constant 0 : i32
    %c0_i32_1 = arith.constant 0 : i32
    return %c0_i32, %c0_i32_0 : i32, i32
  }
  func.func @transform_1(%arg0: i32) -> (i32, i32) {
    %c0_i32 = arith.constant 0 : i32
    %c0_i32_0 = arith.constant 0 : i32
    return %c0_i32, %arg0 : i32, i32
  }
  func.func @transform_2(%arg0: i32) -> (i32, i32) {
    %c0_i32 = arith.constant 0 : i32
    %c0_i32_0 = arith.constant 0 : i32
    return %c0_i32, %arg0 : i32, i32
  }
  func.func @transform_3(%arg0: i32) -> (i32, i32) {
    %c0_i32 = arith.constant 0 : i32
    %c0_i32_0 = arith.constant 0 : i32
    return %c0_i32, %arg0 : i32, i32
  }
  func.func @transform_4(%arg0: i32) -> (i32, i32) {
    %c0_i32 = arith.constant 0 : i32
    %c0_i32_0 = arith.constant 0 : i32
    return %c0_i32, %arg0 : i32, i32
  }
}

</mosaic_0001>

<llo_original>
// kernel: _step_impl.1
$region0: #{_step_impl.1}
  #allocation0 [shape = 'u32[]', space=smem, size = 0x4, offset = 0x4, fixed_abs, tag = 'smem constant byte address 0x4 - core index']
  #allocation1 [shape = 'u32[144,128]{1,0:T(1,128)}', space=vmem, size = 0x12000, scoped, tag = 'internal scratch']
  %s0 = inlined_call_operand.vmem [shape: bf16[1,256], index: 0, kind: input, shape index: {}]
  %s1 = inlined_call_operand.hbm [shape: bf16[256,256], index: 1, kind: input, shape index: {}]
  %s2 = inlined_call_operand.vmem [shape: f32[1,256], index: 2, kind: input, shape index: {}]
  %s3 = inlined_call_operand.vmem [shape: f32[1,256], index: 3, kind: input, shape index: {}]
  %s4 = inlined_call_operand.hbm [shape: f32[1,256], index: 4, kind: output, shape index: {}]
  %s5 = sld [smem:[#allocation0]]
  $region30: #{_step_impl.1} parent=0
    _
  %s7 = ssub.s32 1, %s5
  %s8 = scalar_select 0, %s7, %s5
  $region1: #{_step_impl.1} parent=0
    #allocation2 [shape = 'u8[131072]{0}', space=vmem, size = 0x20000, scoped, tag = 'input window, operand 1, single buffered']
    #allocation3 [shape = 's32[1]{0}', space=sflag, size = 0x4, scoped, tag = 'scoped memory for _step_impl.1']
    #allocation4 [shape = 's32[1]{0}', space=sflag, size = 0x4, scoped, tag = 'scoped memory for _step_impl.1']
    #allocation5 [shape = 'u8[1024]{0}', space=vmem, size = 0x400, scoped, tag = 'output window, operand 0, single buffered']
    %9 = vsyncpa [#allocation3], 0
    %10 = vsyncpa [#allocation4], 0
    // Predicated region
    $region2: #{_step_impl.1} parent=1 // pred_check
      _
    $region3: #{_step_impl.1} parent=1 // pred_check_branch
      %12 = sbr.rel (0) target = $region5
    $region4: #{_step_impl.1} parent=1 // pred_region
      _
    $region5: #{_step_impl.1} parent=1 // pred_fallthru
      _
    // Predicated region
    $region6: #{_step_impl.1} parent=1 // pred_check
      _
    $region7: #{_step_impl.1} parent=1 // pred_check_branch
      %14 = sbr.rel (0) target = $region9
    $region8: #{_step_impl.1} parent=1 // pred_region
      %s16 = ssub.s32 4096, 4096
      %17 = vsyncadd [#allocation3], %s16
      %s18 = sshll.u32 [#allocation2], 4
      %s19 = int_to_ptr.vmem [resolvable:$true] %s18
      %24 = dma.hbm_to_vmem [thread:$0]  %s1, 4096, %s19, [#allocation3], 128, 128, 8
    $region9: #{_step_impl.1} parent=1 // pred_fallthru
      _
    // Predicated region
    $region10: #{_step_impl.1} parent=1 // pred_check
      _
    $region11: #{_step_impl.1} parent=1 // pred_check_branch
      %26 = sbr.rel (0) target = $region13
    $region12: #{_step_impl.1} parent=1 // pred_region
      _
    $region13: #{_step_impl.1} parent=1 // pred_fallthru
      _
    // Predicated region
    $region14: #{_step_impl.1} parent=1 // pred_check
      _
    $region15: #{_step_impl.1} parent=1 // pred_check_branch
      %28 = sbr.rel (0) target = $region17
    $region16: #{_step_impl.1} parent=1 // pred_region
      _
    $region17: #{_step_impl.1} parent=1 // pred_fallthru
      _
    // Predicated region
    $region18: #{_step_impl.1} parent=1 // pred_check
      _
    $region19: #{_step_impl.1} parent=1 // pred_check_branch
      %30 = sbr.rel (0) target = $region21
    $region20: #{_step_impl.1} parent=1 // pred_region
      %31 = dma.done [#allocation3], 4096
    $region21: #{_step_impl.1} parent=1 // pred_fallthru
      _
    %v32 = vld [vmem:[%s0] sm:$0x3]
    %v33 = vld [vmem:[#allocation2] sm:$0xff]
    %v34 = vld [vmem:[#allocation2 + $0x8] sm:$0xff]
    %v35 = vld [vmem:[#allocation2 + $0x10] sm:$0xff]
    %v36 = vld [vmem:[#allocation2 + $0x18] sm:$0xff]
    %v37 = vld [vmem:[#allocation2 + $0x20] sm:$0xff]
    %v38 = vld [vmem:[#allocation2 + $0x28] sm:$0xff]
    %v39 = vld [vmem:[#allocation2 + $0x30] sm:$0xff]
    %v40 = vld [vmem:[#allocation2 + $0x38] sm:$0xff]
    %v41 = vld [vmem:[#allocation2 + $0x40] sm:$0xff]
    %v42 = vld [vmem:[#allocation2 + $0x48] sm:$0xff]
    %v43 = vld [vmem:[#allocation2 + $0x50] sm:$0xff]
    %v44 = vld [vmem:[#allocation2 + $0x58] sm:$0xff]
    %v45 = vld [vmem:[#allocation2 + $0x60] sm:$0xff]
    %v46 = vld [vmem:[#allocation2 + $0x68] sm:$0xff]
    %v47 = vld [vmem:[#allocation2 + $0x70] sm:$0xff]
    %v48 = vld [vmem:[#allocation2 + $0x78] sm:$0xff]
    %v49 = vld [vmem:[#allocation2 + $0x80] sm:$0xff]
    %v50 = vld [vmem:[#allocation2 + $0x88] sm:$0xff]
    %v51 = vld [vmem:[#allocation2 + $0x90] sm:$0xff]
    %v52 = vld [vmem:[#allocation2 + $0x98] sm:$0xff]
    %v53 = vld [vmem:[#allocation2 + $0xa0] sm:$0xff]
    %v54 = vld [vmem:[#allocation2 + $0xa8] sm:$0xff]
    %v55 = vld [vmem:[#allocation2 + $0xb0] sm:$0xff]
    %v56 = vld [vmem:[#allocation2 + $0xb8] sm:$0xff]
    %v57 = vld [vmem:[#allocation2 + $0xc0] sm:$0xff]
    %v58 = vld [vmem:[#allocation2 + $0xc8] sm:$0xff]
    %v59 = vld [vmem:[#allocation2 + $0xd0] sm:$0xff]
    %v60 = vld [vmem:[#allocation2 + $0xd8] sm:$0xff]
    %v61 = vld [vmem:[#allocation2 + $0xe0] sm:$0xff]
    %v62 = vld [vmem:[#allocation2 + $0xe8] sm:$0xff]
    %v63 = vld [vmem:[#allocation2 + $0xf0] sm:$0xff]
    %v64 = vld [vmem:[#allocation2 + $0xf8] sm:$0xff]
    %v65 = vld [vmem:[%s2] sm:$0x3]
    %v68 = vunpack.c.l.s4 1966171168
    %v69 = vunpack.c.0.s8 %v68
    %v70 = vlaneseq
    %v71 = vshrl.u32 %v70, 7
    %v72 = vsub.s32 %v69, %v71
    %v73 = vrot.slane %v32, %v72
    %v74 = vcombine.high %v73, %v73
    %v76 = vunpack.c.l.s4 1966171168
    %v77 = vunpack.c.0.s8 %v76
    %v78 = vlaneseq
    %v79 = vshrl.u32 %v78, 7
    %v80 = vsub.s32 %v77, %v79
    %v81 = vrot.slane %v73, %v80
    %v83 = vunpack.c.l.s4 1966171168
    %v84 = vunpack.c.0.s8 %v83
    %v85 = vlaneseq
    %v86 = vshrl.u32 %v85, 7
    %v87 = vsub.s32 %v84, %v86
    %v88 = vrot.slane %v74, %v87
    %v123 = vunpack.c.l.b16 %v33
    %v124 = vunpack.c.h.b16 %v33
    %v125 = vunpack.c.l.b16 %v34
    %v126 = vunpack.c.h.b16 %v34
    %v127 = vunpack.c.l.b16 %v35
    %v128 = vunpack.c.h.b16 %v35
    %v129 = vunpack.c.l.b16 %v36
    %v130 = vunpack.c.h.b16 %v36
    %v131 = vunpack.c.l.b16 %v37
    %v132 = vunpack.c.h.b16 %v37
    %v133 = vunpack.c.l.b16 %v38
    %v134 = vunpack.c.h.b16 %v38
    %v135 = vunpack.c.l.b16 %v39
    %v136 = vunpack.c.h.b16 %v39
    %v137 = vunpack.c.l.b16 %v40
    %v138 = vunpack.c.h.b16 %v40
    %v139 = vunpack.c.l.b16 %v41
    %v140 = vunpack.c.h.b16 %v41
    %v141 = vunpack.c.l.b16 %v42
    %v142 = vunpack.c.h.b16 %v42
    %v143 = vunpack.c.l.b16 %v43
    %v144 = vunpack.c.h.b16 %v43
    %v145 = vunpack.c.l.b16 %v44
    %v146 = vunpack.c.h.b16 %v44
    %v147 = vunpack.c.l.b16 %v45
    %v148 = vunpack.c.h.b16 %v45
    %v149 = vunpack.c.l.b16 %v46
    %v150 = vunpack.c.h.b16 %v46
    %v151 = vunpack.c.l.b16 %v47
    %v152 = vunpack.c.h.b16 %v47
    %v153 = vunpack.c.l.b16 %v48
    %v154 = vunpack.c.h.b16 %v48
    %v155 = vunpack.c.l.b16 %v49
    %v156 = vunpack.c.h.b16 %v49
    %v157 = vunpack.c.l.b16 %v50
    %v158 = vunpack.c.h.b16 %v50
    %v159 = vunpack.c.l.b16 %v51
    %v160 = vunpack.c.h.b16 %v51
    %v161 = vunpack.c.l.b16 %v52
    %v162 = vunpack.c.h.b16 %v52
    %v163 = vunpack.c.l.b16 %v53
    %v164 = vunpack.c.h.b16 %v53
    %v165 = vunpack.c.l.b16 %v54
    %v166 = vunpack.c.h.b16 %v54
    %v167 = vunpack.c.l.b16 %v55
    %v168 = vunpack.c.h.b16 %v55
    %v169 = vunpack.c.l.b16 %v56
    %v170 = vunpack.c.h.b16 %v56
    %v171 = vunpack.c.l.b16 %v57
    %v172 = vunpack.c.h.b16 %v57
    %v173 = vunpack.c.l.b16 %v58
    %v174 = vunpack.c.h.b16 %v58
    %v175 = vunpack.c.l.b16 %v59
    %v176 = vunpack.c.h.b16 %v59
    %v177 = vunpack.c.l.b16 %v60
    %v178 = vunpack.c.h.b16 %v60
    %v179 = vunpack.c.l.b16 %v61
    %v180 = vunpack.c.h.b16 %v61
    %v181 = vunpack.c.l.b16 %v62
    %v182 = vunpack.c.h.b16 %v62
    %v183 = vunpack.c.l.b16 %v63
    %v184 = vunpack.c.h.b16 %v63
    %v185 = vunpack.c.l.b16 %v64
    %v186 = vunpack.c.h.b16 %v64
    %v187 = vpack.c.b16 %v125, %v123
    %v188 = vpack.c.b16 %v126, %v124
    %v189 = vpack.c.b16 %v129, %v127
    %v190 = vpack.c.b16 %v130, %v128
    %v191 = vpack.c.b16 %v133, %v131
    %v192 = vpack.c.b16 %v134, %v132
    %v193 = vpack.c.b16 %v137, %v135
    %v194 = vpack.c.b16 %v138, %v136
    %v195 = vpack.c.b16 %v141, %v139
    %v196 = vpack.c.b16 %v142, %v140
    %v197 = vpack.c.b16 %v145, %v143
    %v198 = vpack.c.b16 %v146, %v144
    %v199 = vpack.c.b16 %v149, %v147
    %v200 = vpack.c.b16 %v150, %v148
    %v201 = vpack.c.b16 %v153, %v151
    %v202 = vpack.c.b16 %v154, %v152
    %v203 = vpack.c.b16 %v157, %v155
    %v204 = vpack.c.b16 %v158, %v156
    %v205 = vpack.c.b16 %v161, %v159
    %v206 = vpack.c.b16 %v162, %v160
    %v207 = vpack.c.b16 %v165, %v163
    %v208 = vpack.c.b16 %v166, %v164
    %v209 = vpack.c.b16 %v169, %v167
    %v210 = vpack.c.b16 %v170, %v168
    %v211 = vpack.c.b16 %v173, %v171
    %v212 = vpack.c.b16 %v174, %v172
    %v213 = vpack.c.b16 %v177, %v175
    %v214 = vpack.c.b16 %v178, %v176
    %v215 = vpack.c.b16 %v181, %v179
    %v216 = vpack.c.b16 %v182, %v180
    %v217 = vpack.c.b16 %v185, %v183
    %v218 = vpack.c.b16 %v186, %v184
    %v252 = vlaneseq
    %v253 = vshrl.u32 %v252, 7
    %v254 = vsub.s32 0, %v253
    %v255 = vrot.slane %v65, %v254
    %v256 = vlaneseq
    %v257 = vshrl.u32 %v256, 7
    %v258 = vsub.s32 1, %v257
    %v259 = vrot.slane %v65, %v258
    %262 = vmatprep.subr.bf16.mxu0 %v202
    %263 = vmatpush1.bf16.msra.mxu0 %v201
    %264 = vmatprep.subr.bf16.mxu0 %v200
    %265 = vmatpush1.bf16.msra.mxu0 %v199
    %266 = vmatprep.subr.bf16.mxu0 %v198
    %267 = vmatpush1.bf16.msra.mxu0 %v197
    %268 = vmatprep.subr.bf16.mxu0 %v196
    %269 = vmatpush1.bf16.msra.mxu0 %v195
    %270 = vmatprep.subr.bf16.mxu0 %v194
    %271 = vmatpush1.bf16.msra.mxu0 %v193
    %272 = vmatprep.subr.bf16.mxu0 %v192
    %273 = vmatpush1.bf16.msra.mxu0 %v191
    %274 = vmatprep.subr.bf16.mxu0 %v190
    %275 = vmatpush1.bf16.msra.mxu0 %v189
    %276 = vmatprep.subr.bf16.mxu0 %v188
    %277 = vmatpush1.bf16.msra.mxu0 %v187
    %278 = vmatprep.subr.bf16.mxu0 %v218
    %279 = vmatpush2.bf16.msra.mxu0 %v217
    %280 = vmatprep.subr.bf16.mxu0 %v216
    %281 = vmatpush2.bf16.msra.mxu0 %v215
    %282 = vmatprep.subr.bf16.mxu0 %v214
    %283 = vmatpush2.bf16.msra.mxu0 %v213
    %284 = vmatprep.subr.bf16.mxu0 %v212
    %285 = vmatpush2.bf16.msra.mxu0 %v211
    %286 = vmatprep.subr.bf16.mxu0 %v210
    %287 = vmatpush2.bf16.msra.mxu0 %v209
    %288 = vmatprep.subr.bf16.mxu0 %v208
    %289 = vmatpush2.bf16.msra.mxu0 %v207
    %290 = vmatprep.subr.bf16.mxu0 %v206
    %291 = vmatpush2.bf16.msra.mxu0 %v205
    %292 = vmatprep.subr.bf16.mxu0 %v204
    %293 = vmatpush2.bf16.msra.mxu0 %v203
    %294 = vmatprep.mubr.bf16.mxu0 %v88
    %295 = vmatmul.mubr.bf16.gmra.mxu0 %v81
    %v296 = vpop.f32.mrf.mxu0
    %v297 = vadd.f32 %v255, %v296
    %v298 = vpop.f32.mrf.mxu0
    %v299 = vadd.f32 %v259, %v298
    %v300 = vpop.f32.mrf.mxu0
    %v301 = vpop.f32.mrf.mxu0
    %302 = vdwg.mxu0
    %v303 = vld [vmem:[%s3] sm:$0x3]
    %v304 = vmul.f32 %v303, -0.09
    %v305 = vtanh.pop %v297
    %v306 = vtanh.pop %v299
    %v307 = vmul.f32 %v305, 0.09
    %v308 = vmul.f32 %v306, 0.09
    %v311 = vcombine.low %v307, %v308
    %v313 = vunpack.c.l.s4 1966171168
    %v314 = vunpack.c.0.s8 %v313
    %v315 = vlaneseq
    %v316 = vshrl.u32 %v315, 7
    %v317 = vsub.s32 %v314, %v316
    %v318 = vrot.slane %v311, %v317
    %v320 = vunpack.c.l.s4 1966171168
    %v321 = vunpack.c.0.s8 %v320
    %v322 = vlaneseq
    %v323 = vshrl.u32 %v322, 7
    %v324 = vsub.s32 %v321, %v323
    %v325 = vrot.slane %v318, %v324
    %v327 = vadd.f32 %v304, %v325
    %v328 = vlaneseq
    %vm329 = vcmp.ge.s32.totalorder %v328, 0
    %vm330 = vcmp.lt.s32.totalorder %v328, 256
    %vm331 = vmand %vm329, %vm330
    %332 = vst.msk [vmem:[#allocation5] sm:$0x3] %vm331, %v327
    // Predicated region
    $region22: #{_step_impl.1} parent=1 // pred_check
      _
    $region23: #{_step_impl.1} parent=1 // pred_check_branch
      %334 = sbr.rel (0) target = $region25
    $region24: #{_step_impl.1} parent=1 // pred_region
      %s336 = ssub.s32 32, 32
      %337 = vsyncadd [#allocation4], %s336
      %s339 = sshll.u32 [#allocation5], 4
      %s340 = int_to_ptr.vmem [resolvable:$true] %s339
      %342 = dma.vmem_to_hbm [thread:$0]  %s340, 32, %s4, [#allocation4]
    $region25: #{_step_impl.1} parent=1 // pred_fallthru
      _
    // Predicated region
    $region26: #{_step_impl.1} parent=1 // pred_check
      _
    $region27: #{_step_impl.1} parent=1 // pred_check_branch
      %344 = sbr.rel (0) target = $region29
    $region28: #{_step_impl.1} parent=1 // pred_region
      %345 = dma.done [#allocation4], 32
    $region29: #{_step_impl.1} parent=1 // pred_fallthru
      _
    %346 = vsyncpa [#allocation3], 1
    %347 = vsyncpa [#allocation4], 1

</llo_original>
